<compile_context>
chip_gen: v6e
topology: v6e:2x2x1
jax: 0.10.0
libtpu: 0.0.40
codegen_flags: <defaults>
</compile_context>

<pallas_src>
import jax
import jax.numpy as jnp
from jax.experimental import pallas as pl
from jax.experimental.pallas import tpu as pltpu


def _round_up(x, m):
    return (x + m - 1) // m * m


def _vmem_budget_bytes():
    """Generation-aware usable-VMEM budget (v7x: 64 MiB, v5e/v6e: 128 MiB)."""
    cap = 64 << 20  # conservative default = smallest (v7x per-TC) physical VMEM
    try:
        cap = int(pltpu.get_tpu_info().vmem_capacity_bytes)
    except Exception:
        pass
    return max(cap - (12 << 20), 24 << 20)


def _pick_v_tile(v_real, h_pad, b_pad, budget):
    """Largest vocab tile (<= round_up(V,128)) whose streamed footprint fits VMEM."""
    v128 = _round_up(v_real, 128)
    for t in (4096, 2048, 1024, 512, 256, 128):
        if t > v128:
            continue  # don't over-pad tiny vocabs
        streamed = 2 * t * (h_pad + 8)          # int8 w_fc tile + f32 scale/bias (x2 bufs)
        streamed += 2 * b_pad * t * 4           # logits out tile (x2 bufs)
        streamed += 4 * b_pad * 128 * 4         # m/l stat tiles
        resident = 2 * b_pad * h_pad * 2        # h_bf (margin for 2 bufs)
        if streamed + resident + (8 << 20) <= budget:
            return t
    return 128


# ----------------------------------------------------------------------------------
# Kernels
# ----------------------------------------------------------------------------------
def _make_gru_kernel(h_pad):
    """ReLU(embedded) -> single GRU step (PyTorch gate order r, z, n)."""

    def kernel(x_ref, h0_ref, w_ih_ref, w_hh_ref, b_ih_ref, b_hh_ref,
               h_new_ref, h_bf_ref):
        x = jnp.maximum(x_ref[...], 0.0).astype(jnp.bfloat16)      # F.relu(embedded)
        h0 = h0_ref[...]
        gi = jnp.dot(x, w_ih_ref[...],
                     preferred_element_type=jnp.float32) + b_ih_ref[...]
        gh = jnp.dot(h0.astype(jnp.bfloat16), w_hh_ref[...],
                     preferred_element_type=jnp.float32) + b_hh_ref[...]
        hp = h_pad
        r = jax.nn.sigmoid(gi[:, 0:hp] + gh[:, 0:hp])
        z = jax.nn.sigmoid(gi[:, hp:2 * hp] + gh[:, hp:2 * hp])
        n = jnp.tanh(gi[:, 2 * hp:3 * hp] + r * gh[:, 2 * hp:3 * hp])
        h_new = (1.0 - z) * n + z * h0
        h_new_ref[...] = h_new
        h_bf_ref[...] = h_new.astype(jnp.bfloat16)                 # cached once for fc

    return kernel


def _make_proj_kernel(b_pad, v_tile, v_real):
    """One vocab tile: int8-dequant fc matmul + per-tile online-softmax stats."""

    def kernel(h_ref, w_ref, scale_ref, bias_ref, logits_ref, m_ref, l_ref):
        v = pl.program_id(0)
        # int8 weights -> bf16 in VMEM (exact), f32 accumulation on the MXU.
        acc = jnp.dot(h_ref[...], w_ref[...].astype(jnp.bfloat16),
                      preferred_element_type=jnp.float32)
        logits = acc * scale_ref[...] + bias_ref[...]
        logits_ref[...] = logits                                   # lane-dense full tile

        # Per-tile softmax stats (padded vocab lanes masked out).
        col = jax.lax.broadcasted_iota(jnp.int32, logits.shape, 1) + v * v_tile
        valid = col < v_real
        neg = jnp.float32(-1e30)
        m_tile = jnp.max(jnp.where(valid, logits, neg), axis=1, keepdims=True)
        l_tile = jnp.sum(jnp.where(valid, jnp.exp(logits - m_tile), 0.0),
                         axis=1, keepdims=True)
        m_ref[0] = jnp.broadcast_to(m_tile, (b_pad, 128))
        l_ref[0] = jnp.broadcast_to(l_tile, (b_pad, 128))

    return kernel


# ----------------------------------------------------------------------------------
# Parameter preparation (one-time): pad, pre-transpose to (K, N), cast / quantize.
# ----------------------------------------------------------------------------------
def prepare_params(params, embed_size, hidden_size, vocab_size):
    e_pad = _round_up(embed_size, 128)
    h_pad = _round_up(hidden_size, 128)
    budget = _vmem_budget_bytes()
    v_tile = _pick_v_tile(vocab_size, h_pad, 8, budget)   # assume >=8 batch rows
    v_pad = _round_up(vocab_size, v_tile)

    def pad_gates_mat(w, in_dim, in_pad):
        # PyTorch (3H, in), gate order (r,z,n) -> (in_pad, 3*H_pad), gate-major cols.
        w3 = w.reshape(3, hidden_size, in_dim)
        w3 = jnp.pad(w3, ((0, 0), (0, h_pad - hidden_size), (0, in_pad - in_dim)))
        return w3.transpose(2, 0, 1).reshape(in_pad, 3 * h_pad)

    def pad_gates_vec(b):
        b3 = b.reshape(3, hidden_size)
        b3 = jnp.pad(b3, ((0, 0), (0, h_pad - hidden_size)))
        return b3.reshape(1, 3 * h_pad)

    # int8 quantization of the vocab projection (per-column scales, exact rescale
    # after the f32-accumulated matmul).  bf16 compute -> works on v5e/v6e/v7x alike.
    w_fc_t = params["w_fc"].T.astype(jnp.float32)                      # (H, V)
    scale = jnp.maximum(jnp.max(jnp.abs(w_fc_t), axis=0) / 127.0, 1e-12)
    w_q = jnp.clip(jnp.round(w_fc_t / scale[None, :]), -127.0, 127.0).astype(jnp.int8)
    w_q = jnp.pad(w_q, ((0, h_pad - hidden_size), (0, v_pad - vocab_size)))
    scale_pad = jnp.pad(scale, (0, v_pad - vocab_size), constant_values=1.0)
    b_fc_pad = jnp.pad(params["b_fc"], (0, v_pad - vocab_size))

    return {
        "emb": jnp.pad(params["embedding"],
                       ((0, 0), (0, e_pad - embed_size))).astype(jnp.float32),
        "w_ih": pad_gates_mat(params["w_ih"], embed_size, e_pad).astype(jnp.bfloat16),
        "w_hh": pad_gates_mat(params["w_hh"], hidden_size, h_pad).astype(jnp.bfloat16),
        "b_ih": pad_gates_vec(params["b_ih"]).astype(jnp.float32),
        "b_hh": pad_gates_vec(params["b_hh"]).astype(jnp.float32),
        "w_fc_q": w_q,                                                 # (H_pad, V_pad) int8
        "fc_scale": scale_pad.reshape(1, v_pad).astype(jnp.float32),
        "b_fc": b_fc_pad.reshape(1, v_pad).astype(jnp.float32),
        # static metadata
        "embed_size": embed_size, "hidden_size": hidden_size, "vocab_size": vocab_size,
        "e_pad": e_pad, "h_pad": h_pad, "v_pad": v_pad, "v_tile": v_tile,
    }


# ----------------------------------------------------------------------------------
# Forward wrapper (mirrors DecoderRNN.forward(input, hidden))
# ----------------------------------------------------------------------------------
def decoder_rnn_forward(tokens, hidden, prepared):
    """tokens: (B,) int ids; hidden: (1, B, H) f32 -> (log_probs (B, V), hidden (1, B, H))."""
    e_pad, h_pad = prepared["e_pad"], prepared["h_pad"]
    v_pad, v_tile = prepared["v_pad"], prepared["v_tile"]
    v_real = prepared["vocab_size"]
    hidden_size = prepared["hidden_size"]
    batch = tokens.shape[0]
    b_pad = _round_up(batch, 8)
    n_v = v_pad // v_tile
    budget = _vmem_budget_bytes()

    # --- embedding gather hoisted to the wrapper (B rows, trivial XLA gather) ---
    tokens_pad = jnp.zeros((b_pad,), jnp.int32).at[:batch].set(tokens.astype(jnp.int32))
    x = jnp.take(prepared["emb"], tokens_pad, axis=0)                  # (b_pad, e_pad) f32
    h0 = jnp.zeros((b_pad, h_pad), jnp.float32).at[:batch, :hidden_size].set(
        hidden[0].astype(jnp.float32))

    # --- GRU step kernel (un-gridded; everything fits VMEM comfortably) ---
    gru_bytes = ((x.size + h0.size) * 4
                 + (prepared["w_ih"].size + prepared["w_hh"].size) * 2
                 + (prepared["b_ih"].size + prepared["b_hh"].size) * 4
                 + b_pad * h_pad * (4 + 2))
    gru_vmem = int(min(max(gru_bytes + (8 << 20), 16 << 20), budget))

    h_new_pad, h_bf = pl.pallas_call(
        _make_gru_kernel(h_pad),
        out_shape=(jax.ShapeDtypeStruct((b_pad, h_pad), jnp.float32),
                   jax.ShapeDtypeStruct((b_pad, h_pad), jnp.bfloat16)),
        compiler_params=pltpu.CompilerParams(vmem_limit_bytes=gru_vmem),
    )(x, h0, prepared["w_ih"], prepared["w_hh"], prepared["b_ih"], prepared["b_hh"])

    # --- vocab projection kernel: V-tiled, fully parallel grid, online stats ---
    proj_bytes = (2 * v_tile * (h_pad + 8)          # int8 w_fc + scale/bias tiles (x2)
                  + 2 * b_pad * v_tile * 4          # logits out tile (x2)
                  + 4 * b_pad * 128 * 4             # m/l stat tiles
                  + 2 * b_pad * h_pad * 2)          # resident h_bf
    proj_vmem = int(min(max(proj_bytes + (8 << 20), 16 << 20), budget))

    grid_spec = pltpu.PrefetchScalarGridSpec(
        num_scalar_prefetch=0,
        grid=(n_v,),
        in_specs=[
            pl.BlockSpec((b_pad, h_pad), lambda v: (0, 0)),       # h_bf (resident)
            pl.BlockSpec((h_pad, v_tile), lambda v: (0, v)),      # w_fc int8 (V-tiled)
            pl.BlockSpec((1, v_tile), lambda v: (0, v)),          # per-column scales
            pl.BlockSpec((1, v_tile), lambda v: (0, v)),          # fc bias
        ],
        out_specs=(
            pl.BlockSpec((b_pad, v_tile), lambda v: (0, v)),      # logits tile
            pl.BlockSpec((1, b_pad, 128), lambda v: (v, 0, 0)),   # per-tile max
            pl.BlockSpec((1, b_pad, 128), lambda v: (v, 0, 0)),   # per-tile sum-exp
        ),
    )

    logits_pad, m_out, l_out = pl.pallas_call(
        _make_proj_kernel(b_pad, v_tile, v_real),
        grid_spec=grid_spec,
        out_shape=(
            jax.ShapeDtypeStruct((b_pad, v_pad), jnp.float32),
            jax.ShapeDtypeStruct((n_v, b_pad, 128), jnp.float32),
            jax.ShapeDtypeStruct((n_v, b_pad, 128), jnp.float32),
        ),
        compiler_params=pltpu.CompilerParams(
            dimension_semantics=("parallel",),    # independent tiles -> both TCs on v7x
            vmem_limit_bytes=proj_vmem,
        ),
    )(h_bf, prepared["w_fc_q"], prepared["fc_scale"], prepared["b_fc"])

    # --- finalize LogSoftmax from per-tile stats (tiny (n_v, B) combine) ---
    logits = logits_pad[:batch, :v_real]
    m_t = m_out[:, :batch, 0]                     # (n_v, B)
    l_t = l_out[:, :batch, 0]
    m = jnp.max(m_t, axis=0)                      # (B,)
    lse = m + jnp.log(jnp.sum(jnp.exp(m_t - m[None, :]) * l_t, axis=0))
    logp = logits - lse[:, None]

    return logp, h_new_pad[None, :batch, :hidden_size]


# ----------------------------------------------------------------------------------
# Params / reference
# ----------------------------------------------------------------------------------
def init_params(key, vocab_size, embed_size, hidden_size):
    k = jax.random.split(key, 7)
    scale = 0.1
    return {
        "embedding": scale * jax.random.normal(k[0], (vocab_size, embed_size), jnp.float32),
        "w_ih": scale * jax.random.normal(k[1], (3 * hidden_size, embed_size), jnp.float32),
        "w_hh": scale * jax.random.normal(k[2], (3 * hidden_size, hidden_size), jnp.float32),
        "b_ih": scale * jax.random.normal(k[3], (3 * hidden_size,), jnp.float32),
        "b_hh": scale * jax.random.normal(k[4], (3 * hidden_size,), jnp.float32),
        "w_fc": scale * jax.random.normal(k[5], (vocab_size, hidden_size), jnp.float32),
        "b_fc": scale * jax.random.normal(k[6], (vocab_size,), jnp.float32),
    }


def reference_forward(tokens, hidden, params):
    """Pure-JAX f32 reference matching PyTorch DecoderRNN.forward semantics."""
    x = jnp.maximum(params["embedding"][tokens], 0.0)
    h = hidden[0]
    hs = h.shape[-1]
    gi = x @ params["w_ih"].T + params["b_ih"]
    gh = h @ params["w_hh"].T + params["b_hh"]
    r = jax.nn.sigmoid(gi[:, :hs] + gh[:, :hs])
    z = jax.nn.sigmoid(gi[:, hs:2 * hs] + gh[:, hs:2 * hs])
    n = jnp.tanh(gi[:, 2 * hs:] + r * gh[:, 2 * hs:])
    h_new = (1.0 - z) * n + z * h
    logits = h_new @ params["w_fc"].T + params["b_fc"]
    return jax.nn.log_softmax(logits, axis=1), h_new[None]


if __name__ == "__main__":
    vocab_size, embed_size, hidden_size, batch = 32, 16, 32, 8

    key = jax.random.PRNGKey(0)
    kp, kt, kh = jax.random.split(key, 3)
    params = init_params(kp, vocab_size, embed_size, hidden_size)
    prepared = prepare_params(params, embed_size, hidden_size, vocab_size)

    tokens = jax.random.randint(kt, (batch,), 0, vocab_size, dtype=jnp.int32)
    hidden = jax.random.normal(kh, (1, batch, hidden_size), jnp.float32)

    logp, h_new = decoder_rnn_forward(tokens, hidden, prepared)
    jax.block_until_ready((logp, h_new))

    ref_logp, ref_h = reference_forward(tokens, hidden, params)

    assert logp.shape == (batch, vocab_size)
    assert h_new.shape == (1, batch, hidden_size)
    row_sums = jnp.sum(jnp.exp(logp), axis=1)
    assert bool(jnp.all(jnp.abs(row_sums - 1.0) < 1e-3))
    # bf16 activations/GRU weights + int8 w_fc -> looser tolerance than pure f32.
    assert bool(jnp.allclose(logp, ref_logp, atol=5e-2))
    assert bool(jnp.allclose(h_new, ref_h, atol=2e-2))

    print("KERNEL_OK")
</pallas_src>

<mosaic_0001>
module attributes {stable_mosaic.version = 11 : i64} {
  func.func @kernel(%arg0: memref<8x128xf32, #tpu.memory_space<vmem>>, %arg1: memref<8x128xf32, #tpu.memory_space<vmem>>, %arg2: memref<128x384xbf16, #tpu.memory_space<vmem>>, %arg3: memref<128x384xbf16, #tpu.memory_space<vmem>>, %arg4: memref<1x384xf32, #tpu.memory_space<vmem>>, %arg5: memref<1x384xf32, #tpu.memory_space<vmem>>, %arg6: memref<8x128xf32, #tpu.memory_space<vmem>>, %arg7: memref<8x128xbf16, #tpu.memory_space<vmem>>) attributes {dimension_semantics = [], scalar_prefetch = 0 : i64, scratch_operands = 0 : i64, tpu.core_type = #tpu.core_type<tc>} {
    %c0 = arith.constant 0 : index
    %c0_0 = arith.constant 0 : index
    %0 = vector.load %arg0[%c0, %c0_0] : memref<8x128xf32, #tpu.memory_space<vmem>>, vector<8x128xf32>
    %cst = arith.constant 0.000000e+00 : f32
    %1 = vector.broadcast %cst : f32 to vector<8x128xf32>
    %2 = arith.maximumf %0, %1 : vector<8x128xf32>
    %3 = arith.truncf %2 : vector<8x128xf32> to vector<8x128xbf16>
    %c0_1 = arith.constant 0 : index
    %c0_2 = arith.constant 0 : index
    %4 = vector.load %arg1[%c0_1, %c0_2] : memref<8x128xf32, #tpu.memory_space<vmem>>, vector<8x128xf32>
    %c0_3 = arith.constant 0 : index
    %c0_4 = arith.constant 0 : index
    %5 = vector.load %arg2[%c0_3, %c0_4] : memref<128x384xbf16, #tpu.memory_space<vmem>>, vector<128x384xbf16>
    %cst_5 = arith.constant dense<0.000000e+00> : vector<8x384xf32>
    %6 = tpu.matmul %3, %5, %cst_5 {dimension_numbers = #tpu.dot_dimension_numbers<[1], [0], [0], [1], [0, 0, 1, 1], [], []>} : vector<8x128xbf16>, vector<128x384xbf16>, vector<8x384xf32> -> vector<8x384xf32>
    %c0_6 = arith.constant 0 : index
    %c0_7 = arith.constant 0 : index
    %7 = vector.load %arg4[%c0_6, %c0_7] : memref<1x384xf32, #tpu.memory_space<vmem>>, vector<1x384xf32>
    %8 = vector.broadcast %7 : vector<1x384xf32> to vector<8x384xf32>
    %9 = arith.addf %6, %8 : vector<8x384xf32>
    %10 = arith.truncf %4 : vector<8x128xf32> to vector<8x128xbf16>
    %c0_8 = arith.constant 0 : index
    %c0_9 = arith.constant 0 : index
    %11 = vector.load %arg3[%c0_8, %c0_9] : memref<128x384xbf16, #tpu.memory_space<vmem>>, vector<128x384xbf16>
    %cst_10 = arith.constant dense<0.000000e+00> : vector<8x384xf32>
    %12 = tpu.matmul %10, %11, %cst_10 {dimension_numbers = #tpu.dot_dimension_numbers<[1], [0], [0], [1], [0, 0, 1, 1], [], []>} : vector<8x128xbf16>, vector<128x384xbf16>, vector<8x384xf32> -> vector<8x384xf32>
    %c0_11 = arith.constant 0 : index
    %c0_12 = arith.constant 0 : index
    %13 = vector.load %arg5[%c0_11, %c0_12] : memref<1x384xf32, #tpu.memory_space<vmem>>, vector<1x384xf32>
    %14 = vector.broadcast %13 : vector<1x384xf32> to vector<8x384xf32>
    %15 = arith.addf %12, %14 : vector<8x384xf32>
    %16 = vector.extract_strided_slice %9 {offsets = [0, 0], sizes = [8, 128], strides = [1, 1]} : vector<8x384xf32> to vector<8x128xf32>
    %17 = vector.extract_strided_slice %15 {offsets = [0, 0], sizes = [8, 128], strides = [1, 1]} : vector<8x384xf32> to vector<8x128xf32>
    %18 = arith.addf %16, %17 : vector<8x128xf32>
    %19 = arith.negf %18 : vector<8x128xf32>
    %20 = math.exp %19 : vector<8x128xf32>
    %cst_13 = arith.constant 1.000000e+00 : f32
    %21 = vector.broadcast %cst_13 : f32 to vector<8x128xf32>
    %22 = arith.addf %21, %20 : vector<8x128xf32>
    %23 = arith.divf %21, %22 : vector<8x128xf32>
    %24 = vector.extract_strided_slice %9 {offsets = [0, 128], sizes = [8, 128], strides = [1, 1]} : vector<8x384xf32> to vector<8x128xf32>
    %25 = vector.extract_strided_slice %15 {offsets = [0, 128], sizes = [8, 128], strides = [1, 1]} : vector<8x384xf32> to vector<8x128xf32>
    %26 = arith.addf %24, %25 : vector<8x128xf32>
    %27 = arith.negf %26 : vector<8x128xf32>
    %28 = math.exp %27 : vector<8x128xf32>
    %cst_14 = arith.constant 1.000000e+00 : f32
    %29 = vector.broadcast %cst_14 : f32 to vector<8x128xf32>
    %30 = arith.addf %29, %28 : vector<8x128xf32>
    %31 = arith.divf %29, %30 : vector<8x128xf32>
    %32 = vector.extract_strided_slice %9 {offsets = [0, 256], sizes = [8, 128], strides = [1, 1]} : vector<8x384xf32> to vector<8x128xf32>
    %33 = vector.extract_strided_slice %15 {offsets = [0, 256], sizes = [8, 128], strides = [1, 1]} : vector<8x384xf32> to vector<8x128xf32>
    %34 = arith.mulf %23, %33 : vector<8x128xf32>
    %35 = arith.addf %32, %34 : vector<8x128xf32>
    %36 = math.tanh %35 : vector<8x128xf32>
    %cst_15 = arith.constant 1.000000e+00 : f32
    %37 = vector.broadcast %cst_15 : f32 to vector<8x128xf32>
    %38 = arith.subf %37, %31 : vector<8x128xf32>
    %39 = arith.mulf %38, %36 : vector<8x128xf32>
    %40 = arith.mulf %31, %4 : vector<8x128xf32>
    %41 = arith.addf %39, %40 : vector<8x128xf32>
    %c0_16 = arith.constant 0 : index
    %c0_17 = arith.constant 0 : index
    %42 = vector.load %arg6[%c0_16, %c0_17] : memref<8x128xf32, #tpu.memory_space<vmem>>, vector<8x128xf32>
    tpu.vector_store %arg6[%c0_16, %c0_17], %41 {strides = array<i32>} : memref<8x128xf32, #tpu.memory_space<vmem>>, vector<8x128xf32>,
    %43 = arith.truncf %41 : vector<8x128xf32> to vector<8x128xbf16>
    %c0_18 = arith.constant 0 : index
    %c0_19 = arith.constant 0 : index
    %44 = vector.load %arg7[%c0_18, %c0_19] : memref<8x128xbf16, #tpu.memory_space<vmem>>, vector<8x128xbf16>
    tpu.vector_store %arg7[%c0_18, %c0_19], %43 {strides = array<i32>} : memref<8x128xbf16, #tpu.memory_space<vmem>>, vector<8x128xbf16>,
    return
  }
}

</mosaic_0001>

<llo_original>
// kernel: tpu_custom_call.1
$region0: #{tpu_custom_call.1}
  #allocation0 [shape = 'u32[]', space=smem, size = 0x4, offset = 0x4, fixed_abs, tag = 'smem constant byte address 0x4 - core index']
  #allocation1 [shape = 'u32[144,128]{1,0:T(1,128)}', space=vmem, size = 0x12000, scoped, tag = 'internal scratch']
  %s0 = inlined_call_operand.hbm [shape: f32[8,128], index: 0, kind: input, shape index: {}]
  %s1 = inlined_call_operand.hbm [shape: f32[8,128], index: 1, kind: input, shape index: {}]
  %s2 = inlined_call_operand.hbm [shape: bf16[128,384], index: 2, kind: input, shape index: {}]
  %s3 = inlined_call_operand.hbm [shape: bf16[128,384], index: 3, kind: input, shape index: {}]
  %s4 = inlined_call_operand.vmem [shape: f32[1,384], index: 4, kind: input, shape index: {}]
  %s5 = inlined_call_operand.vmem [shape: f32[1,384], index: 5, kind: input, shape index: {}]
  %s6 = inlined_call_operand.hbm [shape: f32[8,128], index: 6, kind: output, shape index: {0}]
  %s7 = inlined_call_operand.hbm [shape: bf16[8,128], index: 7, kind: output, shape index: {1}]
  %8 = xla_tuple %s6, %s7
  %s9 = sld [smem:[#allocation0]]
  $region58: #{tpu_custom_call.1} parent=0
    _
  %s11 = ssub.s32 1, %s9
  %s12 = scalar_select 0, %s11, %s9
  $region1: #{tpu_custom_call.1} parent=0
    #allocation2 [shape = 'u8[4096]{0}', space=vmem, size = 0x1000, scoped, tag = 'input window, operand 0, single buffered']
    #allocation3 [shape = 's32[1]{0}', space=sflag, size = 0x4, scoped, tag = 'scoped memory for tpu_custom_call.1']
    #allocation4 [shape = 's32[1]{0}', space=sflag, size = 0x4, scoped, tag = 'scoped memory for tpu_custom_call.1']
    #allocation5 [shape = 'u8[4096]{0}', space=vmem, size = 0x1000, scoped, tag = 'input window, operand 1, single buffered']
    #allocation6 [shape = 's32[1]{0}', space=sflag, size = 0x4, scoped, tag = 'scoped memory for tpu_custom_call.1']
    #allocation7 [shape = 'u8[98304]{0}', space=vmem, size = 0x18000, scoped, tag = 'input window, operand 2, single buffered']
    #allocation8 [shape = 'u8[98304]{0}', space=vmem, size = 0x18000, scoped, tag = 'input window, operand 3, single buffered']
    #allocation9 [shape = 's32[1]{0}', space=sflag, size = 0x4, scoped, tag = 'scoped memory for tpu_custom_call.1']
    #allocation10 [shape = 'u8[4096]{0}', space=vmem, size = 0x1000, scoped, tag = 'output window, operand 0, single buffered']
    #allocation11 [shape = 'u8[2048]{0}', space=vmem, size = 0x800, scoped, tag = 'output window, operand 1, single buffered']
    #allocation12 [shape = 's32[1]{0}', space=sflag, size = 0x4, scoped, tag = 'scoped memory for tpu_custom_call.1']
    %13 = vsyncpa [#allocation3], 0
    %14 = vsyncpa [#allocation6], 0
    %15 = vsyncpa [#allocation9], 0
    %16 = vsyncpa [#allocation4], 0
    %17 = vsyncpa [#allocation12], 0
    // Predicated region
    $region2: #{tpu_custom_call.1} parent=1 // pred_check
      _
    $region3: #{tpu_custom_call.1} parent=1 // pred_check_branch
      %19 = sbr.rel (0) target = $region5
    $region4: #{tpu_custom_call.1} parent=1 // pred_region
      %s21 = ssub.s32 128, 128
      %22 = vsyncadd [#allocation3], %s21
      %s24 = sshll.u32 [#allocation2], 4
      %s25 = int_to_ptr.vmem [resolvable:$true] %s24
      %27 = dma.hbm_to_vmem [thread:$0]  %s0, 128, %s25, [#allocation3]
    $region5: #{tpu_custom_call.1} parent=1 // pred_fallthru
      _
    // Predicated region
    $region6: #{tpu_custom_call.1} parent=1 // pred_check
      _
    $region7: #{tpu_custom_call.1} parent=1 // pred_check_branch
      %29 = sbr.rel (0) target = $region9
    $region8: #{tpu_custom_call.1} parent=1 // pred_region
      %s31 = ssub.s32 128, 128
      %32 = vsyncadd [#allocation6], %s31
      %s34 = sshll.u32 [#allocation5], 4
      %s35 = int_to_ptr.vmem [resolvable:$true] %s34
      %37 = dma.hbm_to_vmem [thread:$0]  %s1, 128, %s35, [#allocation6]
    $region9: #{tpu_custom_call.1} parent=1 // pred_fallthru
      _
    // Predicated region
    $region10: #{tpu_custom_call.1} parent=1 // pred_check
      _
    $region11: #{tpu_custom_call.1} parent=1 // pred_check_branch
      %39 = sbr.rel (0) target = $region13
    $region12: #{tpu_custom_call.1} parent=1 // pred_region
      %s41 = ssub.s32 3072, 3072
      %42 = vsyncadd [#allocation6], %s41
      %s43 = sshll.u32 [#allocation7], 4
      %s44 = int_to_ptr.vmem [resolvable:$true] %s43
      %49 = dma.hbm_to_vmem [thread:$0]  %s2, 3072, %s44, [#allocation6], 192, 192, 12
    $region13: #{tpu_custom_call.1} parent=1 // pred_fallthru
      _
    // Predicated region
    $region14: #{tpu_custom_call.1} parent=1 // pred_check
      _
    $region15: #{tpu_custom_call.1} parent=1 // pred_check_branch
      %51 = sbr.rel (0) target = $region17
    $region16: #{tpu_custom_call.1} parent=1 // pred_region
      %s53 = ssub.s32 3072, 3072
      %54 = vsyncadd [#allocation9], %s53
      %s55 = sshll.u32 [#allocation8], 4
      %s56 = int_to_ptr.vmem [resolvable:$true] %s55
      %61 = dma.hbm_to_vmem [thread:$0]  %s3, 3072, %s56, [#allocation9], 192, 192, 12
    $region17: #{tpu_custom_call.1} parent=1 // pred_fallthru
      _
    // Predicated region
    $region18: #{tpu_custom_call.1} parent=1 // pred_check
      _
    $region19: #{tpu_custom_call.1} parent=1 // pred_check_branch
      %63 = sbr.rel (0) target = $region21
    $region20: #{tpu_custom_call.1} parent=1 // pred_region
      _
    $region21: #{tpu_custom_call.1} parent=1 // pred_fallthru
      _
    // Predicated region
    $region22: #{tpu_custom_call.1} parent=1 // pred_check
      _
    $region23: #{tpu_custom_call.1} parent=1 // pred_check_branch
      %65 = sbr.rel (0) target = $region25
    $region24: #{tpu_custom_call.1} parent=1 // pred_region
      _
    $region25: #{tpu_custom_call.1} parent=1 // pred_fallthru
      _
    // Predicated region
    $region26: #{tpu_custom_call.1} parent=1 // pred_check
      _
    $region27: #{tpu_custom_call.1} parent=1 // pred_check_branch
      %67 = sbr.rel (0) target = $region29
    $region28: #{tpu_custom_call.1} parent=1 // pred_region
      %68 = dma.done [#allocation3], 128
    $region29: #{tpu_custom_call.1} parent=1 // pred_fallthru
      _
    // Predicated region
    $region30: #{tpu_custom_call.1} parent=1 // pred_check
      _
    $region31: #{tpu_custom_call.1} parent=1 // pred_check_branch
      %70 = sbr.rel (0) target = $region33
    $region32: #{tpu_custom_call.1} parent=1 // pred_region
      %71 = dma.done [#allocation6], 128
    $region33: #{tpu_custom_call.1} parent=1 // pred_fallthru
      _
    // Predicated region
    $region34: #{tpu_custom_call.1} parent=1 // pred_check
      _
    $region35: #{tpu_custom_call.1} parent=1 // pred_check_branch
      %73 = sbr.rel (0) target = $region37
    $region36: #{tpu_custom_call.1} parent=1 // pred_region
      %74 = dma.done [#allocation6], 3072
    $region37: #{tpu_custom_call.1} parent=1 // pred_fallthru
      _
    // Predicated region
    $region38: #{tpu_custom_call.1} parent=1 // pred_check
      _
    $region39: #{tpu_custom_call.1} parent=1 // pred_check_branch
      %76 = sbr.rel (0) target = $region41
    $region40: #{tpu_custom_call.1} parent=1 // pred_region
      %77 = dma.done [#allocation9], 3072
    $region41: #{tpu_custom_call.1} parent=1 // pred_fallthru
      _
    %v79 = vld [vmem:[#allocation2] sm:$0xff]
    %v80 = vmax.f32 %v79, 0.0
    %v81 = vpack.c.bf16 %v80, %v80
    %v82 = vld [vmem:[#allocation5] sm:$0xff]
    %v83 = vld [vmem:[#allocation7] sm:$0xff]
    %v84 = vld [vmem:[#allocation7 + $0x8] sm:$0xf]
    %v85 = vld [vmem:[#allocation7 + $0xc] sm:$0xff]
    %v86 = vld [vmem:[#allocation7 + $0x14] sm:$0xf]
    %v87 = vld [vmem:[#allocation7 + $0x18] sm:$0xff]
    %v88 = vld [vmem:[#allocation7 + $0x20] sm:$0xf]
    %v89 = vld [vmem:[#allocation7 + $0x24] sm:$0xff]
    %v90 = vld [vmem:[#allocation7 + $0x2c] sm:$0xf]
    %v91 = vld [vmem:[#allocation7 + $0x30] sm:$0xff]
    %v92 = vld [vmem:[#allocation7 + $0x38] sm:$0xf]
    %v93 = vld [vmem:[#allocation7 + $0x3c] sm:$0xff]
    %v94 = vld [vmem:[#allocation7 + $0x44] sm:$0xf]
    %v95 = vld [vmem:[#allocation7 + $0x48] sm:$0xff]
    %v96 = vld [vmem:[#allocation7 + $0x50] sm:$0xf]
    %v97 = vld [vmem:[#allocation7 + $0x54] sm:$0xff]
    %v98 = vld [vmem:[#allocation7 + $0x5c] sm:$0xf]
    %v99 = vld [vmem:[#allocation7 + $0x60] sm:$0xff]
    %v100 = vld [vmem:[#allocation7 + $0x68] sm:$0xf]
    %v101 = vld [vmem:[#allocation7 + $0x6c] sm:$0xff]
    %v102 = vld [vmem:[#allocation7 + $0x74] sm:$0xf]
    %v103 = vld [vmem:[#allocation7 + $0x78] sm:$0xff]
    %v104 = vld [vmem:[#allocation7 + $0x80] sm:$0xf]
    %v105 = vld [vmem:[#allocation7 + $0x84] sm:$0xff]
    %v106 = vld [vmem:[#allocation7 + $0x8c] sm:$0xf]
    %v107 = vld [vmem:[#allocation7 + $0x90] sm:$0xff]
    %v108 = vld [vmem:[#allocation7 + $0x98] sm:$0xf]
    %v109 = vld [vmem:[#allocation7 + $0x9c] sm:$0xff]
    %v110 = vld [vmem:[#allocation7 + $0xa4] sm:$0xf]
    %v111 = vld [vmem:[#allocation7 + $0xa8] sm:$0xff]
    %v112 = vld [vmem:[#allocation7 + $0xb0] sm:$0xf]
    %v113 = vld [vmem:[#allocation7 + $0xb4] sm:$0xff]
    %v114 = vld [vmem:[#allocation7 + $0xbc] sm:$0xf]
    %v115 = vld [vmem:[%s4] sm:$0x7]
    %v117 = vlaneseq
    %v118 = vshrl.u32 %v117, 7
    %v119 = vsub.s32 0, %v118
    %v120 = vrot.slane %v115, %v119
    %v121 = vlaneseq
    %v122 = vshrl.u32 %v121, 7
    %v123 = vsub.s32 1, %v122
    %v124 = vrot.slane %v115, %v123
    %v125 = vlaneseq
    %v126 = vshrl.u32 %v125, 7
    %v127 = vsub.s32 2, %v126
    %v128 = vrot.slane %v115, %v127
    %v164 = vunpack.c.l.b16 %v83
    %v165 = vunpack.c.h.b16 %v83
    %v166 = vunpack.c.l.b16 %v84
    %v167 = vunpack.c.l.b16 %v85
    %v168 = vunpack.c.h.b16 %v85
    %v169 = vunpack.c.l.b16 %v86
    %v170 = vunpack.c.l.b16 %v87
    %v171 = vunpack.c.h.b16 %v87
    %v172 = vunpack.c.l.b16 %v88
    %v173 = vunpack.c.l.b16 %v89
    %v174 = vunpack.c.h.b16 %v89
    %v175 = vunpack.c.l.b16 %v90
    %v176 = vunpack.c.l.b16 %v91
    %v177 = vunpack.c.h.b16 %v91
    %v178 = vunpack.c.l.b16 %v92
    %v179 = vunpack.c.l.b16 %v93
    %v180 = vunpack.c.h.b16 %v93
    %v181 = vunpack.c.l.b16 %v94
    %v182 = vunpack.c.l.b16 %v95
    %v183 = vunpack.c.h.b16 %v95
    %v184 = vunpack.c.l.b16 %v96
    %v185 = vunpack.c.l.b16 %v97
    %v186 = vunpack.c.h.b16 %v97
    %v187 = vunpack.c.l.b16 %v98
    %v188 = vunpack.c.l.b16 %v99
    %v189 = vunpack.c.h.b16 %v99
    %v190 = vunpack.c.l.b16 %v100
    %v191 = vunpack.c.l.b16 %v101
    %v192 = vunpack.c.h.b16 %v101
    %v193 = vunpack.c.l.b16 %v102
    %v194 = vunpack.c.l.b16 %v103
    %v195 = vunpack.c.h.b16 %v103
    %v196 = vunpack.c.l.b16 %v104
    %v197 = vunpack.c.l.b16 %v105
    %v198 = vunpack.c.h.b16 %v105
    %v199 = vunpack.c.l.b16 %v106
    %v200 = vunpack.c.l.b16 %v107
    %v201 = vunpack.c.h.b16 %v107
    %v202 = vunpack.c.l.b16 %v108
    %v203 = vunpack.c.l.b16 %v109
    %v204 = vunpack.c.h.b16 %v109
    %v205 = vunpack.c.l.b16 %v110
    %v206 = vunpack.c.l.b16 %v111
    %v207 = vunpack.c.h.b16 %v111
    %v208 = vunpack.c.l.b16 %v112
    %v209 = vunpack.c.l.b16 %v113
    %v210 = vunpack.c.h.b16 %v113
    %v211 = vunpack.c.l.b16 %v114
    %v212 = vpack.c.b16 %v167, %v164
    %v213 = vpack.c.b16 %v168, %v165
    %v214 = vpack.c.b16 %v169, %v166
    %v215 = vpack.c.b16 %v173, %v170
    %v216 = vpack.c.b16 %v174, %v171
    %v217 = vpack.c.b16 %v175, %v172
    %v218 = vpack.c.b16 %v179, %v176
    %v219 = vpack.c.b16 %v180, %v177
    %v220 = vpack.c.b16 %v181, %v178
    %v221 = vpack.c.b16 %v185, %v182
    %v222 = vpack.c.b16 %v186, %v183
    %v223 = vpack.c.b16 %v187, %v184
    %v224 = vpack.c.b16 %v191, %v188
    %v225 = vpack.c.b16 %v192, %v189
    %v226 = vpack.c.b16 %v193, %v190
    %v227 = vpack.c.b16 %v197, %v194
    %v228 = vpack.c.b16 %v198, %v195
    %v229 = vpack.c.b16 %v199, %v196
    %v230 = vpack.c.b16 %v203, %v200
    %v231 = vpack.c.b16 %v204, %v201
    %v232 = vpack.c.b16 %v205, %v202
    %v233 = vpack.c.b16 %v209, %v206
    %v234 = vpack.c.b16 %v210, %v207
    %v235 = vpack.c.b16 %v211, %v208
    %260 = vmatprep.subr.bf16.mxu0 %v234
    %261 = vmatpush1.bf16.msra.mxu0 %v233
    %262 = vmatprep.subr.bf16.mxu0 %v231
    %263 = vmatpush1.bf16.msra.mxu0 %v230
    %264 = vmatprep.subr.bf16.mxu0 %v228
    %265 = vmatpush1.bf16.msra.mxu0 %v227
    %266 = vmatprep.subr.bf16.mxu0 %v225
    %267 = vmatpush1.bf16.msra.mxu0 %v224
    %268 = vmatprep.subr.bf16.mxu0 %v222
    %269 = vmatpush1.bf16.msra.mxu0 %v221
    %270 = vmatprep.subr.bf16.mxu0 %v219
    %271 = vmatpush1.bf16.msra.mxu0 %v218
    %272 = vmatprep.subr.bf16.mxu0 %v216
    %273 = vmatpush1.bf16.msra.mxu0 %v215
    %274 = vmatprep.subr.bf16.mxu0 %v213
    %275 = vmatpush1.bf16.msra.mxu0 %v212
    %276 = vmatprep.subr.bf16.mxu0 0
    %277 = vmatpush2.bf16.msra.mxu0 0
    %278 = vmatprep.subr.bf16.mxu0 0
    %279 = vmatpush2.bf16.msra.mxu0 0
    %280 = vmatprep.subr.bf16.mxu0 0
    %281 = vmatpush2.bf16.msra.mxu0 0
    %282 = vmatprep.subr.bf16.mxu0 0
    %283 = vmatpush2.bf16.msra.mxu0 0
    %284 = vmatprep.subr.bf16.mxu0 0
    %285 = vmatpush2.bf16.msra.mxu0 0
    %286 = vmatprep.subr.bf16.mxu0 0
    %287 = vmatpush2.bf16.msra.mxu0 0
    %288 = vmatprep.subr.bf16.mxu0 0
    %289 = vmatpush2.bf16.msra.mxu0 0
    %290 = vmatprep.subr.bf16.mxu0 0
    %291 = vmatpush2.bf16.msra.mxu0 0
    %292 = vmatprep.mubr.bf16.mxu0 0
    %293 = vmatmul.mubr.bf16.gmra.mxu0 %v81
    %v294 = vpop.f32.mrf.mxu0
    %v295 = vadd.f32 %v120, %v294
    %v296 = vpop.f32.mrf.mxu0
    %v297 = vadd.f32 %v124, %v296
    %v298 = vpop.f32.mrf.mxu0
    %v299 = vpop.f32.mrf.mxu0
    %300 = vdwg.mxu0
    %301 = vmatprep.subr.bf16.mxu0 0
    %302 = vmatpush1.bf16.msra.mxu0 %v235
    %303 = vmatprep.subr.bf16.mxu0 0
    %304 = vmatpush1.bf16.msra.mxu0 %v232
    %305 = vmatprep.subr.bf16.mxu0 0
    %306 = vmatpush1.bf16.msra.mxu0 %v229
    %307 = vmatprep.subr.bf16.mxu0 0
    %308 = vmatpush1.bf16.msra.mxu0 %v226
    %309 = vmatprep.subr.bf16.mxu0 0
    %310 = vmatpush1.bf16.msra.mxu0 %v223
    %311 = vmatprep.subr.bf16.mxu0 0
    %312 = vmatpush1.bf16.msra.mxu0 %v220
    %313 = vmatprep.subr.bf16.mxu0 0
    %314 = vmatpush1.bf16.msra.mxu0 %v217
    %315 = vmatprep.subr.bf16.mxu0 0
    %316 = vmatpush1.bf16.msra.mxu0 %v214
    %317 = vmatprep.subr.bf16.mxu0 0
    %318 = vmatpush2.bf16.msra.mxu0 0
    %319 = vmatprep.subr.bf16.mxu0 0
    %320 = vmatpush2.bf16.msra.mxu0 0
    %321 = vmatprep.subr.bf16.mxu0 0
    %322 = vmatpush2.bf16.msra.mxu0 0
    %323 = vmatprep.subr.bf16.mxu0 0
    %324 = vmatpush2.bf16.msra.mxu0 0
    %325 = vmatprep.subr.bf16.mxu0 0
    %326 = vmatpush2.bf16.msra.mxu0 0
    %327 = vmatprep.subr.bf16.mxu0 0
    %328 = vmatpush2.bf16.msra.mxu0 0
    %329 = vmatprep.subr.bf16.mxu0 0
    %330 = vmatpush2.bf16.msra.mxu0 0
    %331 = vmatprep.subr.bf16.mxu0 0
    %332 = vmatpush2.bf16.msra.mxu0 0
    %333 = vmatprep.mubr.bf16.mxu0 0
    %334 = vmatmul.mubr.bf16.gmra.mxu0 %v81
    %v335 = vpop.f32.mrf.mxu0
    %v336 = vadd.f32 %v128, %v335
    %v337 = vpop.f32.mrf.mxu0
    %v338 = vpop.f32.mrf.mxu0
    %v339 = vpop.f32.mrf.mxu0
    %340 = vdwg.mxu0
    %v341 = vpack.c.bf16 %v82, %v82
    %v342 = vld [vmem:[#allocation8] sm:$0xff]
    %v343 = vld [vmem:[#allocation8 + $0x8] sm:$0xf]
    %v344 = vld [vmem:[#allocation8 + $0xc] sm:$0xff]
    %v345 = vld [vmem:[#allocation8 + $0x14] sm:$0xf]
    %v346 = vld [vmem:[#allocation8 + $0x18] sm:$0xff]
    %v347 = vld [vmem:[#allocation8 + $0x20] sm:$0xf]
    %v348 = vld [vmem:[#allocation8 + $0x24] sm:$0xff]
    %v349 = vld [vmem:[#allocation8 + $0x2c] sm:$0xf]
    %v350 = vld [vmem:[#allocation8 + $0x30] sm:$0xff]
    %v351 = vld [vmem:[#allocation8 + $0x38] sm:$0xf]
    %v352 = vld [vmem:[#allocation8 + $0x3c] sm:$0xff]
    %v353 = vld [vmem:[#allocation8 + $0x44] sm:$0xf]
    %v354 = vld [vmem:[#allocation8 + $0x48] sm:$0xff]
    %v355 = vld [vmem:[#allocation8 + $0x50] sm:$0xf]
    %v356 = vld [vmem:[#allocation8 + $0x54] sm:$0xff]
    %v357 = vld [vmem:[#allocation8 + $0x5c] sm:$0xf]
    %v358 = vld [vmem:[#allocation8 + $0x60] sm:$0xff]
    %v359 = vld [vmem:[#allocation8 + $0x68] sm:$0xf]
    %v360 = vld [vmem:[#allocation8 + $0x6c] sm:$0xff]
    %v361 = vld [vmem:[#allocation8 + $0x74] sm:$0xf]
    %v362 = vld [vmem:[#allocation8 + $0x78] sm:$0xff]
    %v363 = vld [vmem:[#allocation8 + $0x80] sm:$0xf]
    %v364 = vld [vmem:[#allocation8 + $0x84] sm:$0xff]
    %v365 = vld [vmem:[#allocation8 + $0x8c] sm:$0xf]
    %v366 = vld [vmem:[#allocation8 + $0x90] sm:$0xff]
    %v367 = vld [vmem:[#allocation8 + $0x98] sm:$0xf]
    %v368 = vld [vmem:[#allocation8 + $0x9c] sm:$0xff]
    %v369 = vld [vmem:[#allocation8 + $0xa4] sm:$0xf]
    %v370 = vld [vmem:[#allocation8 + $0xa8] sm:$0xff]
    %v371 = vld [vmem:[#allocation8 + $0xb0] sm:$0xf]
    %v372 = vld [vmem:[#allocation8 + $0xb4] sm:$0xff]
    %v373 = vld [vmem:[#allocation8 + $0xbc] sm:$0xf]
    %v374 = vld [vmem:[%s5] sm:$0x7]
    %v376 = vlaneseq
    %v377 = vshrl.u32 %v376, 7
    %v378 = vsub.s32 0, %v377
    %v379 = vrot.slane %v374, %v378
    %v380 = vlaneseq
    %v381 = vshrl.u32 %v380, 7
    %v382 = vsub.s32 1, %v381
    %v383 = vrot.slane %v374, %v382
    %v384 = vlaneseq
    %v385 = vshrl.u32 %v384, 7
    %v386 = vsub.s32 2, %v385
    %v387 = vrot.slane %v374, %v386
    %v423 = vunpack.c.l.b16 %v342
    %v424 = vunpack.c.h.b16 %v342
    %v425 = vunpack.c.l.b16 %v343
    %v426 = vunpack.c.l.b16 %v344
    %v427 = vunpack.c.h.b16 %v344
    %v428 = vunpack.c.l.b16 %v345
    %v429 = vunpack.c.l.b16 %v346
    %v430 = vunpack.c.h.b16 %v346
    %v431 = vunpack.c.l.b16 %v347
    %v432 = vunpack.c.l.b16 %v348
    %v433 = vunpack.c.h.b16 %v348
    %v434 = vunpack.c.l.b16 %v349
    %v435 = vunpack.c.l.b16 %v350
    %v436 = vunpack.c.h.b16 %v350
    %v437 = vunpack.c.l.b16 %v351
    %v438 = vunpack.c.l.b16 %v352
    %v439 = vunpack.c.h.b16 %v352
    %v440 = vunpack.c.l.b16 %v353
    %v441 = vunpack.c.l.b16 %v354
    %v442 = vunpack.c.h.b16 %v354
    %v443 = vunpack.c.l.b16 %v355
    %v444 = vunpack.c.l.b16 %v356
    %v445 = vunpack.c.h.b16 %v356
    %v446 = vunpack.c.l.b16 %v357
    %v447 = vunpack.c.l.b16 %v358
    %v448 = vunpack.c.h.b16 %v358
    %v449 = vunpack.c.l.b16 %v359
    %v450 = vunpack.c.l.b16 %v360
    %v451 = vunpack.c.h.b16 %v360
    %v452 = vunpack.c.l.b16 %v361
    %v453 = vunpack.c.l.b16 %v362
    %v454 = vunpack.c.h.b16 %v362
    %v455 = vunpack.c.l.b16 %v363
    %v456 = vunpack.c.l.b16 %v364
    %v457 = vunpack.c.h.b16 %v364
    %v458 = vunpack.c.l.b16 %v365
    %v459 = vunpack.c.l.b16 %v366
    %v460 = vunpack.c.h.b16 %v366
    %v461 = vunpack.c.l.b16 %v367
    %v462 = vunpack.c.l.b16 %v368
    %v463 = vunpack.c.h.b16 %v368
    %v464 = vunpack.c.l.b16 %v369
    %v465 = vunpack.c.l.b16 %v370
    %v466 = vunpack.c.h.b16 %v370
    %v467 = vunpack.c.l.b16 %v371
    %v468 = vunpack.c.l.b16 %v372
    %v469 = vunpack.c.h.b16 %v372
    %v470 = vunpack.c.l.b16 %v373
    %v471 = vpack.c.b16 %v426, %v423
    %v472 = vpack.c.b16 %v427, %v424
    %v473 = vpack.c.b16 %v428, %v425
    %v474 = vpack.c.b16 %v432, %v429
    %v475 = vpack.c.b16 %v433, %v430
    %v476 = vpack.c.b16 %v434, %v431
    %v477 = vpack.c.b16 %v438, %v435
    %v478 = vpack.c.b16 %v439, %v436
    %v479 = vpack.c.b16 %v440, %v437
    %v480 = vpack.c.b16 %v444, %v441
    %v481 = vpack.c.b16 %v445, %v442
    %v482 = vpack.c.b16 %v446, %v443
    %v483 = vpack.c.b16 %v450, %v447
    %v484 = vpack.c.b16 %v451, %v448
    %v485 = vpack.c.b16 %v452, %v449
    %v486 = vpack.c.b16 %v456, %v453
    %v487 = vpack.c.b16 %v457, %v454
    %v488 = vpack.c.b16 %v458, %v455
    %v489 = vpack.c.b16 %v462, %v459
    %v490 = vpack.c.b16 %v463, %v460
    %v491 = vpack.c.b16 %v464, %v461
    %v492 = vpack.c.b16 %v468, %v465
    %v493 = vpack.c.b16 %v469, %v466
    %v494 = vpack.c.b16 %v470, %v467
    %519 = vmatprep.subr.bf16.mxu0 %v493
    %520 = vmatpush1.bf16.msra.mxu0 %v492
    %521 = vmatprep.subr.bf16.mxu0 %v490
    %522 = vmatpush1.bf16.msra.mxu0 %v489
    %523 = vmatprep.subr.bf16.mxu0 %v487
    %524 = vmatpush1.bf16.msra.mxu0 %v486
    %525 = vmatprep.subr.bf16.mxu0 %v484
    %526 = vmatpush1.bf16.msra.mxu0 %v483
    %527 = vmatprep.subr.bf16.mxu0 %v481
    %528 = vmatpush1.bf16.msra.mxu0 %v480
    %529 = vmatprep.subr.bf16.mxu0 %v478
    %530 = vmatpush1.bf16.msra.mxu0 %v477
    %531 = vmatprep.subr.bf16.mxu0 %v475
    %532 = vmatpush1.bf16.msra.mxu0 %v474
    %533 = vmatprep.subr.bf16.mxu0 %v472
    %534 = vmatpush1.bf16.msra.mxu0 %v471
    %535 = vmatprep.subr.bf16.mxu0 0
    %536 = vmatpush2.bf16.msra.mxu0 0
    %537 = vmatprep.subr.bf16.mxu0 0
    %538 = vmatpush2.bf16.msra.mxu0 0
    %539 = vmatprep.subr.bf16.mxu0 0
    %540 = vmatpush2.bf16.msra.mxu0 0
    %541 = vmatprep.subr.bf16.mxu0 0
    %542 = vmatpush2.bf16.msra.mxu0 0
    %543 = vmatprep.subr.bf16.mxu0 0
    %544 = vmatpush2.bf16.msra.mxu0 0
    %545 = vmatprep.subr.bf16.mxu0 0
    %546 = vmatpush2.bf16.msra.mxu0 0
    %547 = vmatprep.subr.bf16.mxu0 0
    %548 = vmatpush2.bf16.msra.mxu0 0
    %549 = vmatprep.subr.bf16.mxu0 0
    %550 = vmatpush2.bf16.msra.mxu0 0
    %551 = vmatprep.mubr.bf16.mxu0 0
    %552 = vmatmul.mubr.bf16.gmra.mxu0 %v341
    %v553 = vpop.f32.mrf.mxu0
    %v554 = vadd.f32 %v379, %v553
    %v555 = vpop.f32.mrf.mxu0
    %v556 = vadd.f32 %v383, %v555
    %v557 = vpop.f32.mrf.mxu0
    %v558 = vpop.f32.mrf.mxu0
    %559 = vdwg.mxu0
    %560 = vmatprep.subr.bf16.mxu0 0
    %561 = vmatpush1.bf16.msra.mxu0 %v494
    %562 = vmatprep.subr.bf16.mxu0 0
    %563 = vmatpush1.bf16.msra.mxu0 %v491
    %564 = vmatprep.subr.bf16.mxu0 0
    %565 = vmatpush1.bf16.msra.mxu0 %v488
    %566 = vmatprep.subr.bf16.mxu0 0
    %567 = vmatpush1.bf16.msra.mxu0 %v485
    %568 = vmatprep.subr.bf16.mxu0 0
    %569 = vmatpush1.bf16.msra.mxu0 %v482
    %570 = vmatprep.subr.bf16.mxu0 0
    %571 = vmatpush1.bf16.msra.mxu0 %v479
    %572 = vmatprep.subr.bf16.mxu0 0
    %573 = vmatpush1.bf16.msra.mxu0 %v476
    %574 = vmatprep.subr.bf16.mxu0 0
    %575 = vmatpush1.bf16.msra.mxu0 %v473
    %576 = vmatprep.subr.bf16.mxu0 0
    %577 = vmatpush2.bf16.msra.mxu0 0
    %578 = vmatprep.subr.bf16.mxu0 0
    %579 = vmatpush2.bf16.msra.mxu0 0
    %580 = vmatprep.subr.bf16.mxu0 0
    %581 = vmatpush2.bf16.msra.mxu0 0
    %582 = vmatprep.subr.bf16.mxu0 0
    %583 = vmatpush2.bf16.msra.mxu0 0
    %584 = vmatprep.subr.bf16.mxu0 0
    %585 = vmatpush2.bf16.msra.mxu0 0
    %586 = vmatprep.subr.bf16.mxu0 0
    %587 = vmatpush2.bf16.msra.mxu0 0
    %588 = vmatprep.subr.bf16.mxu0 0
    %589 = vmatpush2.bf16.msra.mxu0 0
    %590 = vmatprep.subr.bf16.mxu0 0
    %591 = vmatpush2.bf16.msra.mxu0 0
    %592 = vmatprep.mubr.bf16.mxu0 0
    %593 = vmatmul.mubr.bf16.gmra.mxu0 %v341
    %v594 = vpop.f32.mrf.mxu0
    %v595 = vadd.f32 %v387, %v594
    %v596 = vpop.f32.mrf.mxu0
    %v597 = vpop.f32.mrf.mxu0
    %v598 = vpop.f32.mrf.mxu0
    %599 = vdwg.mxu0
    %v600 = vadd.f32 %v295, %v554
    %v601 = vxor.u32 %v600, 2147483648
    %v602 = vmul.f32 %v601, 1.442695
    %v603 = vpow.pop %v602
    %v604 = vadd.f32 %v603, 1.0
    %v605 = vrcp.pop %v604
    %v606 = vmul.f32 1.0, %v605
    %v607 = vadd.f32 %v297, %v556
    %v608 = vxor.u32 %v607, 2147483648
    %v609 = vmul.f32 %v608, 1.442695
    %v610 = vpow.pop %v609
    %v611 = vadd.f32 %v610, 1.0
    %v612 = vrcp.pop %v611
    %v613 = vmul.f32 1.0, %v612
    %v614 = vmul.f32 %v606, %v595
    %v615 = vadd.f32 %v336, %v614
    %v616 = vtanh.pop %v615
    %v617 = vsub.f32 1.0, %v613
    %v618 = vmul.f32 %v617, %v616
    %v619 = vmul.f32 %v613, %v82
    %v620 = vadd.f32 %v618, %v619
    %621 = vst [vmem:[#allocation10] sm:$0xff] %v620
    %v622 = vpack.c.bf16 %v620, %v620
    %623 = vst [vmem:[#allocation11] sm:$0xf] %v622
    // Predicated region
    $region42: #{tpu_custom_call.1} parent=1 // pred_check
      _
    $region43: #{tpu_custom_call.1} parent=1 // pred_check_branch
      %625 = sbr.rel (0) target = $region45
    $region44: #{tpu_custom_call.1} parent=1 // pred_region
      %s627 = ssub.s32 128, 128
      %628 = vsyncadd [#allocation4], %s627
      %s630 = sshll.u32 [#allocation10], 4
      %s631 = int_to_ptr.vmem [resolvable:$true] %s630
      %633 = dma.vmem_to_hbm [thread:$0]  %s631, 128, %s6, [#allocation4]
    $region45: #{tpu_custom_call.1} parent=1 // pred_fallthru
      _
    // Predicated region
    $region46: #{tpu_custom_call.1} parent=1 // pred_check
      _
    $region47: #{tpu_custom_call.1} parent=1 // pred_check_branch
      %635 = sbr.rel (0) target = $region49
    $region48: #{tpu_custom_call.1} parent=1 // pred_region
      %s637 = ssub.s32 64, 64
      %638 = vsyncadd [#allocation12], %s637
      %s640 = sshll.u32 [#allocation11], 4
      %s641 = int_to_ptr.vmem [resolvable:$true] %s640
      %643 = dma.vmem_to_hbm [thread:$0]  %s641, 64, %s7, [#allocation12]
    $region49: #{tpu_custom_call.1} parent=1 // pred_fallthru
      _
    // Predicated region
    $region50: #{tpu_custom_call.1} parent=1 // pred_check
      _
    $region51: #{tpu_custom_call.1} parent=1 // pred_check_branch
      %645 = sbr.rel (0) target = $region53
    $region52: #{tpu_custom_call.1} parent=1 // pred_region
      %646 = dma.done [#allocation4], 128
    $region53: #{tpu_custom_call.1} parent=1 // pred_fallthru
      _
    // Predicated region
    $region54: #{tpu_custom_call.1} parent=1 // pred_check
      _
    $region55: #{tpu_custom_call.1} parent=1 // pred_check_branch
      %648 = sbr.rel (0) target = $region57
    $region56: #{tpu_custom_call.1} parent=1 // pred_region
      %649 = dma.done [#allocation12], 64
    $region57: #{tpu_custom_call.1} parent=1 // pred_fallthru
      _
    %650 = vsyncpa [#allocation3], 1
    %651 = vsyncpa [#allocation6], 1
    %652 = vsyncpa [#allocation9], 1
    %653 = vsyncpa [#allocation4], 1
    %654 = vsyncpa [#allocation12], 1

</llo_original>
